<compile_context>
chip_gen: v6e
topology: v6e:2x2x1
jax: 0.10.0
libtpu: 0.0.40
codegen_flags: <defaults>
</compile_context>

<pallas_src>
import functools

import jax
import jax.numpy as jnp
from jax import lax
from jax.experimental import pallas as pl
from jax.experimental.pallas import tpu as pltpu


def _round_up(a, m):
    return (a + m - 1) // m * m


def _make_ffn_kernel(h_real, hp, row_tile):
    """Builds the kernel for a (row_tile, hp) tile; h_real <= hp is the true H."""
    inv_h = 1.0 / float(h_real)
    need_mask = hp != h_real

    def kernel(x_ref, p_ref, w1_ref, w2_ref, out_ref):
        # x_ref: (row_tile, hp) tile of rows (zero padded past h_real / R).
        x = x_ref[...].astype(jnp.float32)

        gamma = p_ref[0:1, :]
        beta = p_ref[1:2, :]
        b1 = p_ref[2:3, :]
        b2 = p_ref[3:4, :]

        # ---- LayerNorm (TF style: eps inside the sqrt) ----
        # Padded columns of x are zero, so the raw sum already equals the sum
        # over real columns; divide by the real H explicitly.
        u = jnp.sum(x, axis=-1, keepdims=True) * inv_h
        xc = x - u
        if need_mask:
            # Zero the padded columns so they don't pollute the variance.
            col = lax.broadcasted_iota(jnp.int32, (row_tile, hp), 1)
            xc = jnp.where(col < h_real, xc, 0.0)
        s = jnp.sum(xc * xc, axis=-1, keepdims=True) * inv_h
        h = xc * lax.rsqrt(s + 1e-12)
        h = gamma * h + beta  # padded gamma/beta are zero -> padded cols stay 0

        # ---- Linear_1 + ReLU (bf16 MXU matmul, f32 accumulate) ----
        h1 = jnp.dot(h.astype(jnp.bfloat16), w1_ref[...],
                     preferred_element_type=jnp.float32) + b1
        h1 = jnp.maximum(h1, 0.0)

        # ---- Linear_2 ----
        h2 = jnp.dot(h1.astype(jnp.bfloat16), w2_ref[...],
                     preferred_element_type=jnp.float32) + b2

        # ---- Dropout_1 (inference -> identity) + residual ----
        # TODO(synk): training-mode dropout (hidden_dropout_prob) not
        # implemented; inference semantics (identity) are used here.
        out_ref[...] = (h2 + x).astype(out_ref.dtype)

    return kernel


@functools.partial(jax.jit, static_argnames=("row_tile",))
def pointwise_feedforward(x, gamma, beta, w1, b1, w2, b2, *, row_tile=512):
    """x: [B, S, H].  w1, w2: PyTorch-convention (out, in) weight matrices."""
    B, S, H = x.shape
    R = B * S

    # Lane-dense hidden dim and sublane-aligned row tiles.
    Hp = _round_up(H, 128)
    rt = _round_up(min(row_tile, _round_up(R, 8)), 8)
    Rp = _round_up(R, rt)

    # ---- Pad / prepare operands on the host side (zero padding). ----
    x2 = x.reshape(R, H)
    if (Rp, Hp) != (R, H):
        x2 = jnp.pad(x2, ((0, Rp - R), (0, Hp - H)))

    pad_h = ((0, Hp - H), (0, Hp - H))
    # Pre-transpose so the kernel does h @ W^T directly; bf16 for the MXU.
    w1t = jnp.pad(jnp.asarray(w1, jnp.float32).T, pad_h).astype(jnp.bfloat16)
    w2t = jnp.pad(jnp.asarray(w2, jnp.float32).T, pad_h).astype(jnp.bfloat16)

    params = jnp.stack([jnp.asarray(gamma, jnp.float32),
                        jnp.asarray(beta, jnp.float32),
                        jnp.asarray(b1, jnp.float32),
                        jnp.asarray(b2, jnp.float32)])          # (4, H)
    if Hp != H:
        params = jnp.pad(params, ((0, 0), (0, Hp - H)))         # (4, Hp)

    grid = (Rp // rt,)
    row_spec = pl.BlockSpec((rt, Hp), lambda i: (i, 0))
    p_spec = pl.BlockSpec((4, Hp), lambda i: (0, 0))
    w_spec = pl.BlockSpec((Hp, Hp), lambda i: (0, 0))

    # ---- VMEM budget: raise the scoped limit only when needed (keep the
    # cap v7x-safe; weights are bf16 so realistic H still fits in 64 MiB). ----
    itemsize = jnp.dtype(x.dtype).itemsize
    vmem_need = (
        2 * rt * Hp * itemsize          # input double buffer
        + 2 * rt * Hp * itemsize        # output double buffer
        + 2 * 4 * Hp * 4                # stacked params
        + 2 * 2 * Hp * Hp * 2           # two bf16 weight matrices (dbl-buf alloc)
        + 6 * rt * Hp * 4               # f32 intermediates / headroom
    )
    compiler_kwargs = dict(dimension_semantics=("parallel",))
    if vmem_need > 32 * 1024 * 1024:
        compiler_kwargs["vmem_limit_bytes"] = min(
            int(vmem_need * 1.25), 120 * 1024 * 1024)

    out2 = pl.pallas_call(
        _make_ffn_kernel(H, Hp, rt),
        out_shape=jax.ShapeDtypeStruct((Rp, Hp), x.dtype),
        grid_spec=pltpu.PrefetchScalarGridSpec(
            num_scalar_prefetch=0,
            grid=grid,
            in_specs=[row_spec, p_spec, w_spec, w_spec],
            out_specs=row_spec,
        ),
        compiler_params=pltpu.CompilerParams(**compiler_kwargs),
    )(x2, params, w1t, w2t)

    return out2[:R, :H].reshape(B, S, H)


def _reference(x, gamma, beta, w1, b1, w2, b2):
    x32 = x.astype(jnp.float32)
    u = jnp.mean(x32, axis=-1, keepdims=True)
    s = jnp.mean((x32 - u) ** 2, axis=-1, keepdims=True)
    h = (x32 - u) / jnp.sqrt(s + 1e-12)
    h = gamma * h + beta
    h = h @ w1.T + b1
    h = jnp.maximum(h, 0.0)
    h = h @ w2.T + b2
    return (h + x32).astype(x.dtype)


if __name__ == "__main__":
    B, S, H = 2, 8, 32  # batch=2, seq=8, hidden=32
    key = jax.random.PRNGKey(0)
    kx, k1, k2, k3, k4 = jax.random.split(key, 5)

    x = jax.random.normal(kx, (B, S, H), dtype=jnp.float32)

    # Deterministic parameter init (shapes match nn.Linear(H, H), LayerNorm(H)).
    bound = 1.0 / jnp.sqrt(H)
    w1 = jax.random.uniform(k1, (H, H), minval=-bound, maxval=bound)
    b1 = jax.random.uniform(k2, (H,), minval=-bound, maxval=bound)
    w2 = jax.random.uniform(k3, (H, H), minval=-bound, maxval=bound)
    b2 = jax.random.uniform(k4, (H,), minval=-bound, maxval=bound)
    gamma = jnp.ones((H,), dtype=jnp.float32)
    beta = jnp.zeros((H,), dtype=jnp.float32)

    out = pointwise_feedforward(x, gamma, beta, w1, b1, w2, b2)
    out = jax.block_until_ready(out)

    ref = _reference(x, gamma, beta, w1, b1, w2, b2)
    assert out.shape == (B, S, H)
    # bf16 matmul path -> slightly looser tolerance than pure f32.
    assert jnp.allclose(out, ref, atol=5e-2, rtol=5e-2), "mismatch vs reference"

    print("KERNEL_OK")
</pallas_src>

<mosaic_0001>
module attributes {stable_mosaic.version = 11 : i64} {
  func.func @kernel(%arg0: i32, %arg1: memref<16x128xf32, #tpu.memory_space<vmem>>, %arg2: memref<4x128xf32, #tpu.memory_space<vmem>>, %arg3: memref<128x128xbf16, #tpu.memory_space<vmem>>, %arg4: memref<128x128xbf16, #tpu.memory_space<vmem>>, %arg5: memref<16x128xf32, #tpu.memory_space<vmem>>) attributes {dimension_semantics = [#tpu.dimension_semantics<parallel>], iteration_bounds = array<i64: 1>, scalar_prefetch = 0 : i64, scratch_operands = 0 : i64, tpu.core_type = #tpu.core_type<tc>, window_params = [{transform_indices = @transform_0, window_bounds = array<i64: 16, 128>}, {pipeline_mode = #tpu.pipeline_mode<synchronous>, transform_indices = @transform_1, window_bounds = array<i64: 4, 128>}, {pipeline_mode = #tpu.pipeline_mode<synchronous>, transform_indices = @transform_2, window_bounds = array<i64: 128, 128>}, {pipeline_mode = #tpu.pipeline_mode<synchronous>, transform_indices = @transform_3, window_bounds = array<i64: 128, 128>}, {transform_indices = @transform_4, window_bounds = array<i64: 16, 128>}]} {
    %c0 = arith.constant 0 : index
    %c0_0 = arith.constant 0 : index
    %0 = vector.load %arg1[%c0, %c0_0] : memref<16x128xf32, #tpu.memory_space<vmem>>, vector<16x128xf32>
    %c0_1 = arith.constant 0 : index
    %c0_2 = arith.constant 0 : index
    %1 = vector.load %arg2[%c0_1, %c0_2] : memref<4x128xf32, #tpu.memory_space<vmem>>, vector<1x128xf32>
    %c1 = arith.constant 1 : index
    %c0_3 = arith.constant 0 : index
    %2 = vector.load %arg2[%c1, %c0_3] : memref<4x128xf32, #tpu.memory_space<vmem>>, vector<1x128xf32>
    %c2 = arith.constant 2 : index
    %c0_4 = arith.constant 0 : index
    %3 = vector.load %arg2[%c2, %c0_4] : memref<4x128xf32, #tpu.memory_space<vmem>>, vector<1x128xf32>
    %c3 = arith.constant 3 : index
    %c0_5 = arith.constant 0 : index
    %4 = vector.load %arg2[%c3, %c0_5] : memref<4x128xf32, #tpu.memory_space<vmem>>, vector<1x128xf32>
    %cst = arith.constant dense<0.000000e+00> : vector<16xf32>
    %5 = vector.multi_reduction <add>, %0, %cst [1] : vector<16x128xf32> to vector<16xf32>
    %6 = vector.shape_cast %5 : vector<16xf32> to vector<16x1xf32>
    %cst_6 = arith.constant 3.125000e-02 : f32
    %7 = vector.broadcast %cst_6 : f32 to vector<16x1xf32>
    %8 = arith.mulf %6, %7 : vector<16x1xf32>
    %9 = vector.broadcast %8 : vector<16x1xf32> to vector<16x128xf32>
    %10 = arith.subf %0, %9 : vector<16x128xf32>
    %11 = tpu.iota {dimensions = array<i32: 1>} : vector<16x128xi32>
    %c32_i32 = arith.constant 32 : i32
    %12 = vector.broadcast %c32_i32 : i32 to vector<16x128xi32>
    %13 = arith.cmpi slt, %11, %12 : vector<16x128xi32>
    %cst_7 = arith.constant 0.000000e+00 : f32
    %14 = vector.broadcast %cst_7 : f32 to vector<16x128xf32>
    %15 = arith.select %13, %10, %14 : vector<16x128xi1>, vector<16x128xf32>
    %16 = arith.mulf %15, %15 : vector<16x128xf32>
    %cst_8 = arith.constant dense<0.000000e+00> : vector<16xf32>
    %17 = vector.multi_reduction <add>, %16, %cst_8 [1] : vector<16x128xf32> to vector<16xf32>
    %18 = vector.shape_cast %17 : vector<16xf32> to vector<16x1xf32>
    %cst_9 = arith.constant 3.125000e-02 : f32
    %19 = vector.broadcast %cst_9 : f32 to vector<16x1xf32>
    %20 = arith.mulf %18, %19 : vector<16x1xf32>
    %cst_10 = arith.constant 9.99999996E-13 : f32
    %21 = vector.broadcast %cst_10 : f32 to vector<16x1xf32>
    %22 = arith.addf %20, %21 : vector<16x1xf32>
    %23 = math.rsqrt %22 : vector<16x1xf32>
    %24 = vector.broadcast %23 : vector<16x1xf32> to vector<16x128xf32>
    %25 = arith.mulf %15, %24 : vector<16x128xf32>
    %26 = vector.broadcast %1 : vector<1x128xf32> to vector<16x128xf32>
    %27 = arith.mulf %26, %25 : vector<16x128xf32>
    %28 = vector.broadcast %2 : vector<1x128xf32> to vector<16x128xf32>
    %29 = arith.addf %27, %28 : vector<16x128xf32>
    %30 = arith.truncf %29 : vector<16x128xf32> to vector<16x128xbf16>
    %c0_11 = arith.constant 0 : index
    %c0_12 = arith.constant 0 : index
    %31 = vector.load %arg3[%c0_11, %c0_12] : memref<128x128xbf16, #tpu.memory_space<vmem>>, vector<128x128xbf16>
    %cst_13 = arith.constant dense<0.000000e+00> : vector<16x128xf32>
    %32 = tpu.matmul %30, %31, %cst_13 {dimension_numbers = #tpu.dot_dimension_numbers<[1], [0], [0], [1], [0, 0, 1, 1], [], []>} : vector<16x128xbf16>, vector<128x128xbf16>, vector<16x128xf32> -> vector<16x128xf32>
    %33 = vector.broadcast %3 : vector<1x128xf32> to vector<16x128xf32>
    %34 = arith.addf %32, %33 : vector<16x128xf32>
    %cst_14 = arith.constant 0.000000e+00 : f32
    %35 = vector.broadcast %cst_14 : f32 to vector<16x128xf32>
    %36 = arith.maximumf %34, %35 : vector<16x128xf32>
    %37 = arith.truncf %36 : vector<16x128xf32> to vector<16x128xbf16>
    %c0_15 = arith.constant 0 : index
    %c0_16 = arith.constant 0 : index
    %38 = vector.load %arg4[%c0_15, %c0_16] : memref<128x128xbf16, #tpu.memory_space<vmem>>, vector<128x128xbf16>
    %cst_17 = arith.constant dense<0.000000e+00> : vector<16x128xf32>
    %39 = tpu.matmul %37, %38, %cst_17 {dimension_numbers = #tpu.dot_dimension_numbers<[1], [0], [0], [1], [0, 0, 1, 1], [], []>} : vector<16x128xbf16>, vector<128x128xbf16>, vector<16x128xf32> -> vector<16x128xf32>
    %40 = vector.broadcast %4 : vector<1x128xf32> to vector<16x128xf32>
    %41 = arith.addf %39, %40 : vector<16x128xf32>
    %42 = arith.addf %41, %0 : vector<16x128xf32>
    %c0_18 = arith.constant 0 : index
    %c0_19 = arith.constant 0 : index
    %43 = vector.load %arg5[%c0_18, %c0_19] : memref<16x128xf32, #tpu.memory_space<vmem>>, vector<16x128xf32>
    tpu.vector_store %arg5[%c0_18, %c0_19], %42 {strides = array<i32>} : memref<16x128xf32, #tpu.memory_space<vmem>>, vector<16x128xf32>,
    return
  }
  func.func @transform_0(%arg0: i32) -> (i32, i32) {
    %c0_i32 = arith.constant 0 : i32
    %c0_i32_0 = arith.constant 0 : i32
    return %arg0, %c0_i32 : i32, i32
  }
  func.func @transform_1(%arg0: i32) -> (i32, i32) {
    %c0_i32 = arith.constant 0 : i32
    %c0_i32_0 = arith.constant 0 : i32
    %c0_i32_1 = arith.constant 0 : i32
    return %c0_i32, %c0_i32_0 : i32, i32
  }
  func.func @transform_2(%arg0: i32) -> (i32, i32) {
    %c0_i32 = arith.constant 0 : i32
    %c0_i32_0 = arith.constant 0 : i32
    %c0_i32_1 = arith.constant 0 : i32
    return %c0_i32, %c0_i32_0 : i32, i32
  }
  func.func @transform_3(%arg0: i32) -> (i32, i32) {
    %c0_i32 = arith.constant 0 : i32
    %c0_i32_0 = arith.constant 0 : i32
    %c0_i32_1 = arith.constant 0 : i32
    return %c0_i32, %c0_i32_0 : i32, i32
  }
  func.func @transform_4(%arg0: i32) -> (i32, i32) {
    %c0_i32 = arith.constant 0 : i32
    %c0_i32_0 = arith.constant 0 : i32
    return %arg0, %c0_i32 : i32, i32
  }
}

</mosaic_0001>

<llo_original>
// kernel: pointwise_feedforward.1
$region0: #{pointwise_feedforward.1}
  #allocation0 [shape = 'u32[]', space=smem, size = 0x4, offset = 0x4, fixed_abs, tag = 'smem constant byte address 0x4 - core index']
  #allocation1 [shape = 'u32[144,128]{1,0:T(1,128)}', space=vmem, size = 0x12000, scoped, tag = 'internal scratch']
  %s0 = inlined_call_operand.vmem [shape: f32[16,128], index: 0, kind: input, shape index: {}]
  %s1 = inlined_call_operand.vmem [shape: f32[4,128], index: 1, kind: input, shape index: {}]
  %s2 = inlined_call_operand.vmem [shape: bf16[128,128], index: 2, kind: input, shape index: {}]
  %s3 = inlined_call_operand.vmem [shape: bf16[128,128], index: 3, kind: input, shape index: {}]
  %s4 = inlined_call_operand.vmem [shape: f32[16,128], index: 4, kind: output, shape index: {}]
  %s5 = sld [smem:[#allocation0]]
  $region26: #{pointwise_feedforward.1} parent=0
    _
  %s7 = ssub.s32 1, %s5
  %s8 = scalar_select 0, %s7, %s5
  // Predicated region
  $region2: #{pointwise_feedforward.1} parent=0 // pred_check
    _
  $region3: #{pointwise_feedforward.1} parent=0 // pred_check_branch
    %10 = sbr.rel (0) target = $region5
  $region4: #{pointwise_feedforward.1} parent=0 // pred_region
    _
  $region5: #{pointwise_feedforward.1} parent=0 // pred_fallthru
    _
  // Predicated region
  $region6: #{pointwise_feedforward.1} parent=0 // pred_check
    _
  $region7: #{pointwise_feedforward.1} parent=0 // pred_check_branch
    %12 = sbr.rel (0) target = $region9
  $region8: #{pointwise_feedforward.1} parent=0 // pred_region
    _
  $region9: #{pointwise_feedforward.1} parent=0 // pred_fallthru
    _
  // Predicated region
  $region10: #{pointwise_feedforward.1} parent=0 // pred_check
    _
  $region11: #{pointwise_feedforward.1} parent=0 // pred_check_branch
    %14 = sbr.rel (0) target = $region13
  $region12: #{pointwise_feedforward.1} parent=0 // pred_region
    _
  $region13: #{pointwise_feedforward.1} parent=0 // pred_fallthru
    _
  // Predicated region
  $region14: #{pointwise_feedforward.1} parent=0 // pred_check
    _
  $region15: #{pointwise_feedforward.1} parent=0 // pred_check_branch
    %16 = sbr.rel (0) target = $region17
  $region16: #{pointwise_feedforward.1} parent=0 // pred_region
    _
  $region17: #{pointwise_feedforward.1} parent=0 // pred_fallthru
    _
  %v18 = vld [vmem:[%s0] sm:$0xff]
  %v19 = vld [vmem:[%s0 + $0x8] sm:$0xff]
  %v20 = vld [vmem:[%s1] sm:$0x1]
  %v21 = vld [vmem:[%s1 + $0x1] sm:$0x1]
  %v22 = vld [vmem:[%s1 + $0x2] sm:$0x1]
  %v23 = vld [vmem:[%s1 + $0x3] sm:$0x1]
  %24 = vadd.xlane.f32.xlu0 %v18
  %v25 = vpop.xlane.xlu0 %24
  %26 = vadd.xlane.f32.xlu0 %v19
  %v27 = vpop.xlane.xlu0 %26
  %v28 = vmul.f32 %v25, 0.03125
  %v29 = vmul.f32 %v27, 0.03125
  %v30 = vsub.f32 %v18, %v28
  %v31 = vsub.f32 %v19, %v29
  %v32 = vlaneseq
  %v33 = vand.u32 %v32, 127
  %vm34 = vcmp.lt.s32.totalorder %v33, 32
  %v35 = vsel %vm34, %v30, 0.0
  %v36 = vsel %vm34, %v31, 0.0
  %v37 = vmul.f32 %v35, %v35
  %v38 = vmul.f32 %v36, %v36
  %39 = vadd.xlane.f32.xlu0 %v37
  %v40 = vpop.xlane.xlu0 %39
  %41 = vadd.xlane.f32.xlu0 %v38
  %v42 = vpop.xlane.xlu0 %41
  %v43 = vmul.f32 %v40, 0.03125
  %v44 = vmul.f32 %v42, 0.03125
  %v45 = vadd.f32 %v43, 1e-12
  %v46 = vadd.f32 %v44, 1e-12
  %v47 = vrsqrt.pop %v45
  %v48 = vrsqrt.pop %v46
  %v49 = vmul.f32 %v35, %v47
  %v50 = vmul.f32 %v36, %v48
  %v51 = vlaneseq
  %v52 = vshrl.u32 %v51, 7
  %v53 = vsub.s32 0, %v52
  %v54 = vrot.slane %v20, %v53
  %v55 = vmul.f32 %v54, %v49
  %v56 = vmul.f32 %v54, %v50
  %v57 = vlaneseq
  %v58 = vshrl.u32 %v57, 7
  %v59 = vsub.s32 0, %v58
  %v60 = vrot.slane %v21, %v59
  %v61 = vadd.f32 %v55, %v60
  %v62 = vadd.f32 %v56, %v60
  %v63 = vpack.c.bf16 %v62, %v61
  %v64 = vld [vmem:[%s2] sm:$0xf]
  %v65 = vld [vmem:[%s2 + $0x4] sm:$0xf]
  %v66 = vld [vmem:[%s2 + $0x8] sm:$0xf]
  %v67 = vld [vmem:[%s2 + $0xc] sm:$0xf]
  %v68 = vld [vmem:[%s2 + $0x10] sm:$0xf]
  %v69 = vld [vmem:[%s2 + $0x14] sm:$0xf]
  %v70 = vld [vmem:[%s2 + $0x18] sm:$0xf]
  %v71 = vld [vmem:[%s2 + $0x1c] sm:$0xf]
  %v72 = vld [vmem:[%s2 + $0x20] sm:$0xf]
  %v73 = vld [vmem:[%s2 + $0x24] sm:$0xf]
  %v74 = vld [vmem:[%s2 + $0x28] sm:$0xf]
  %v75 = vld [vmem:[%s2 + $0x2c] sm:$0xf]
  %v76 = vld [vmem:[%s2 + $0x30] sm:$0xf]
  %v77 = vld [vmem:[%s2 + $0x34] sm:$0xf]
  %v78 = vld [vmem:[%s2 + $0x38] sm:$0xf]
  %v79 = vld [vmem:[%s2 + $0x3c] sm:$0xf]
  %v80 = vlaneseq
  %v81 = vshrl.u32 %v80, 7
  %v82 = vsub.s32 0, %v81
  %v83 = vrot.slane %v22, %v82
  %v100 = vunpack.c.l.b16 %v64
  %v101 = vunpack.c.l.b16 %v65
  %v102 = vunpack.c.l.b16 %v66
  %v103 = vunpack.c.l.b16 %v67
  %v104 = vunpack.c.l.b16 %v68
  %v105 = vunpack.c.l.b16 %v69
  %v106 = vunpack.c.l.b16 %v70
  %v107 = vunpack.c.l.b16 %v71
  %v108 = vunpack.c.l.b16 %v72
  %v109 = vunpack.c.l.b16 %v73
  %v110 = vunpack.c.l.b16 %v74
  %v111 = vunpack.c.l.b16 %v75
  %v112 = vunpack.c.l.b16 %v76
  %v113 = vunpack.c.l.b16 %v77
  %v114 = vunpack.c.l.b16 %v78
  %v115 = vunpack.c.l.b16 %v79
  %v116 = vpack.c.b16 %v101, %v100
  %v117 = vpack.c.b16 %v103, %v102
  %v118 = vpack.c.b16 %v105, %v104
  %v119 = vpack.c.b16 %v107, %v106
  %v120 = vpack.c.b16 %v109, %v108
  %v121 = vpack.c.b16 %v111, %v110
  %v122 = vpack.c.b16 %v113, %v112
  %v123 = vpack.c.b16 %v115, %v114
  %132 = vmatprep.subr.bf16.mxu0 0
  %133 = vmatpush1.bf16.msra.mxu0 %v123
  %134 = vmatprep.subr.bf16.mxu0 0
  %135 = vmatpush1.bf16.msra.mxu0 %v122
  %136 = vmatprep.subr.bf16.mxu0 0
  %137 = vmatpush1.bf16.msra.mxu0 %v121
  %138 = vmatprep.subr.bf16.mxu0 0
  %139 = vmatpush1.bf16.msra.mxu0 %v120
  %140 = vmatprep.subr.bf16.mxu0 0
  %141 = vmatpush1.bf16.msra.mxu0 %v119
  %142 = vmatprep.subr.bf16.mxu0 0
  %143 = vmatpush1.bf16.msra.mxu0 %v118
  %144 = vmatprep.subr.bf16.mxu0 0
  %145 = vmatpush1.bf16.msra.mxu0 %v117
  %146 = vmatprep.subr.bf16.mxu0 0
  %147 = vmatpush1.bf16.msra.mxu0 %v116
  %148 = vmatprep.subr.bf16.mxu0 0
  %149 = vmatpush2.bf16.msra.mxu0 0
  %150 = vmatprep.subr.bf16.mxu0 0
  %151 = vmatpush2.bf16.msra.mxu0 0
  %152 = vmatprep.subr.bf16.mxu0 0
  %153 = vmatpush2.bf16.msra.mxu0 0
  %154 = vmatprep.subr.bf16.mxu0 0
  %155 = vmatpush2.bf16.msra.mxu0 0
  %156 = vmatprep.subr.bf16.mxu0 0
  %157 = vmatpush2.bf16.msra.mxu0 0
  %158 = vmatprep.subr.bf16.mxu0 0
  %159 = vmatpush2.bf16.msra.mxu0 0
  %160 = vmatprep.subr.bf16.mxu0 0
  %161 = vmatpush2.bf16.msra.mxu0 0
  %162 = vmatprep.subr.bf16.mxu0 0
  %163 = vmatpush2.bf16.msra.mxu0 0
  %164 = vmatprep.mubr.bf16.mxu0 0
  %165 = vmatmul.mubr.bf16.gmra.mxu0 %v63
  %v166 = vpop.f32.mrf.mxu0
  %v167 = vadd.f32 %v83, %v166
  %v168 = vpop.f32.mrf.mxu0
  %v169 = vpop.f32.mrf.mxu0
  %v170 = vadd.f32 %v83, %v169
  %v171 = vpop.f32.mrf.mxu0
  %172 = vdwg.mxu0
  %v173 = vmax.f32 %v167, 0.0
  %v174 = vmax.f32 %v170, 0.0
  %v175 = vpack.c.bf16 %v174, %v173
  %v176 = vld [vmem:[%s3] sm:$0xf]
  %v177 = vld [vmem:[%s3 + $0x4] sm:$0xf]
  %v178 = vld [vmem:[%s3 + $0x8] sm:$0xf]
  %v179 = vld [vmem:[%s3 + $0xc] sm:$0xf]
  %v180 = vld [vmem:[%s3 + $0x10] sm:$0xf]
  %v181 = vld [vmem:[%s3 + $0x14] sm:$0xf]
  %v182 = vld [vmem:[%s3 + $0x18] sm:$0xf]
  %v183 = vld [vmem:[%s3 + $0x1c] sm:$0xf]
  %v184 = vld [vmem:[%s3 + $0x20] sm:$0xf]
  %v185 = vld [vmem:[%s3 + $0x24] sm:$0xf]
  %v186 = vld [vmem:[%s3 + $0x28] sm:$0xf]
  %v187 = vld [vmem:[%s3 + $0x2c] sm:$0xf]
  %v188 = vld [vmem:[%s3 + $0x30] sm:$0xf]
  %v189 = vld [vmem:[%s3 + $0x34] sm:$0xf]
  %v190 = vld [vmem:[%s3 + $0x38] sm:$0xf]
  %v191 = vld [vmem:[%s3 + $0x3c] sm:$0xf]
  %v192 = vlaneseq
  %v193 = vshrl.u32 %v192, 7
  %v194 = vsub.s32 0, %v193
  %v195 = vrot.slane %v23, %v194
  %v212 = vunpack.c.l.b16 %v176
  %v213 = vunpack.c.l.b16 %v177
  %v214 = vunpack.c.l.b16 %v178
  %v215 = vunpack.c.l.b16 %v179
  %v216 = vunpack.c.l.b16 %v180
  %v217 = vunpack.c.l.b16 %v181
  %v218 = vunpack.c.l.b16 %v182
  %v219 = vunpack.c.l.b16 %v183
  %v220 = vunpack.c.l.b16 %v184
  %v221 = vunpack.c.l.b16 %v185
  %v222 = vunpack.c.l.b16 %v186
  %v223 = vunpack.c.l.b16 %v187
  %v224 = vunpack.c.l.b16 %v188
  %v225 = vunpack.c.l.b16 %v189
  %v226 = vunpack.c.l.b16 %v190
  %v227 = vunpack.c.l.b16 %v191
  %v228 = vpack.c.b16 %v213, %v212
  %v229 = vpack.c.b16 %v215, %v214
  %v230 = vpack.c.b16 %v217, %v216
  %v231 = vpack.c.b16 %v219, %v218
  %v232 = vpack.c.b16 %v221, %v220
  %v233 = vpack.c.b16 %v223, %v222
  %v234 = vpack.c.b16 %v225, %v224
  %v235 = vpack.c.b16 %v227, %v226
  %244 = vmatprep.subr.bf16.mxu0 0
  %245 = vmatpush1.bf16.msra.mxu0 %v235
  %246 = vmatprep.subr.bf16.mxu0 0
  %247 = vmatpush1.bf16.msra.mxu0 %v234
  %248 = vmatprep.subr.bf16.mxu0 0
  %249 = vmatpush1.bf16.msra.mxu0 %v233
  %250 = vmatprep.subr.bf16.mxu0 0
  %251 = vmatpush1.bf16.msra.mxu0 %v232
  %252 = vmatprep.subr.bf16.mxu0 0
  %253 = vmatpush1.bf16.msra.mxu0 %v231
  %254 = vmatprep.subr.bf16.mxu0 0
  %255 = vmatpush1.bf16.msra.mxu0 %v230
  %256 = vmatprep.subr.bf16.mxu0 0
  %257 = vmatpush1.bf16.msra.mxu0 %v229
  %258 = vmatprep.subr.bf16.mxu0 0
  %259 = vmatpush1.bf16.msra.mxu0 %v228
  %260 = vmatprep.subr.bf16.mxu0 0
  %261 = vmatpush2.bf16.msra.mxu0 0
  %262 = vmatprep.subr.bf16.mxu0 0
  %263 = vmatpush2.bf16.msra.mxu0 0
  %264 = vmatprep.subr.bf16.mxu0 0
  %265 = vmatpush2.bf16.msra.mxu0 0
  %266 = vmatprep.subr.bf16.mxu0 0
  %267 = vmatpush2.bf16.msra.mxu0 0
  %268 = vmatprep.subr.bf16.mxu0 0
  %269 = vmatpush2.bf16.msra.mxu0 0
  %270 = vmatprep.subr.bf16.mxu0 0
  %271 = vmatpush2.bf16.msra.mxu0 0
  %272 = vmatprep.subr.bf16.mxu0 0
  %273 = vmatpush2.bf16.msra.mxu0 0
  %274 = vmatprep.subr.bf16.mxu0 0
  %275 = vmatpush2.bf16.msra.mxu0 0
  %276 = vmatprep.mubr.bf16.mxu0 0
  %277 = vmatmul.mubr.bf16.gmra.mxu0 %v175
  %v278 = vpop.f32.mrf.mxu0
  %v279 = vadd.f32 %v195, %v278
  %v280 = vpop.f32.mrf.mxu0
  %v281 = vpop.f32.mrf.mxu0
  %v282 = vadd.f32 %v195, %v281
  %v283 = vpop.f32.mrf.mxu0
  %284 = vdwg.mxu0
  %v285 = vadd.f32 %v279, %v18
  %v286 = vadd.f32 %v282, %v19
  %287 = vst [vmem:[%s4] sm:$0xff] %v285
  %288 = vst [vmem:[%s4 + $0x8] sm:$0xff] %v286
  // Predicated region
  $region18: #{pointwise_feedforward.1} parent=0 // pred_check
    _
  $region19: #{pointwise_feedforward.1} parent=0 // pred_check_branch
    %290 = sbr.rel (0) target = $region21
  $region20: #{pointwise_feedforward.1} parent=0 // pred_region
    _
  $region21: #{pointwise_feedforward.1} parent=0 // pred_fallthru
    _
  // Predicated region
  $region22: #{pointwise_feedforward.1} parent=0 // pred_check
    _
  $region23: #{pointwise_feedforward.1} parent=0 // pred_check_branch
    %292 = sbr.rel (0) target = $region25
  $region24: #{pointwise_feedforward.1} parent=0 // pred_region
    _
  $region25: #{pointwise_feedforward.1} parent=0 // pred_fallthru
    _

</llo_original>
